<compile_context>
chip_gen: v7x
topology: tpu7x:2x2x1
jax: 0.10.0
libtpu: 0.0.40
codegen_flags: <defaults>
</compile_context>

<pallas_src>
import functools

import jax
import jax.numpy as jnp
from jax.experimental import pallas as pl
from jax.experimental.pallas import tpu as pltpu


# ---------------------------------------------------------------------------
# Kernel 1: streaming partial sums of feat_act / feat_bkg over the T axis.
# ---------------------------------------------------------------------------
def _feat_sum_kernel(feat_act_ref, feat_bkg_ref, act_sum_ref, bkg_sum_ref, *,
                     t_total, nt_per_split):
    c = pl.program_id(0)            # TensorCore split axis ("parallel")
    t = pl.program_id(1)            # T-tile within this split ("arbitrary")
    t_tile = feat_act_ref.shape[1]

    # Init the resident per-split accumulator block on the first T step.
    @pl.when(t == 0)
    def _():
        act_sum_ref[...] = jnp.zeros_like(act_sum_ref)
        bkg_sum_ref[...] = jnp.zeros_like(bkg_sum_ref)

    # Global element offset of this tile along T (unclamped -> drives the mask
    # that zeroes ragged-tail padding and fully-overrun tiles of the 2nd split).
    start = (c * nt_per_split + t) * t_tile
    row = jax.lax.broadcasted_iota(jnp.int32, (1, t_tile, 1), 1)
    valid = (start + row) < t_total

    fa = jnp.where(valid, feat_act_ref[...].astype(jnp.float32), 0.0)
    fb = jnp.where(valid, feat_bkg_ref[...].astype(jnp.float32), 0.0)

    act_sum_ref[...] += jnp.sum(fa, axis=1)[None]      # (1, B, D)
    bkg_sum_ref[...] += jnp.sum(fb, axis=1)[None]


# ---------------------------------------------------------------------------
# Kernel 2: tiny finalize (norms/hinge + BCE terms + scalar mixing).
# ---------------------------------------------------------------------------
def _finalize_kernel(scores_ref, act_sums_ref, bkg_sums_ref, out_ref, *,
                     alpha, beta, margin, t_total):
    inv_t = jnp.float32(1.0 / float(t_total))
    fa_mean = jnp.sum(act_sums_ref[...], axis=0) * inv_t        # (B, D)
    fb_mean = jnp.sum(bkg_sums_ref[...], axis=0) * inv_t        # (B, D)
    act_norm = jnp.sqrt(jnp.sum(fa_mean * fa_mean, axis=1, keepdims=True))
    bkg_norm = jnp.sqrt(jnp.sum(fb_mean * fb_mean, axis=1, keepdims=True))
    loss_act = jnp.maximum(margin - act_norm, 0.0)              # hinge
    loss_um = jnp.mean((loss_act + bkg_norm) ** 2)

    # Packed tiny inputs: [0]=score_act, [1]=score_bkg, [2]=label, all (B, C).
    score_act = scores_ref[0].astype(jnp.float32)
    score_bkg = scores_ref[1].astype(jnp.float32)
    label = scores_ref[2].astype(jnp.float32)

    # loss_cls = BCE(score_act, label / sum(label, dim=1))  (PyTorch log clamp).
    label = label / jnp.sum(label, axis=1, keepdims=True)
    log_a = jnp.maximum(jnp.log(score_act), -100.0)
    log_1ma = jnp.maximum(jnp.log(1.0 - score_act), -100.0)
    loss_cls = -jnp.mean(label * log_a + (1.0 - label) * log_1ma)

    # loss_be = BCE(score_bkg, uniform 1/C) in closed form (no broadcast temp).
    inv_c = jnp.float32(1.0 / score_bkg.shape[1])
    log_b = jnp.maximum(jnp.log(score_bkg), -100.0)
    log_1mb = jnp.maximum(jnp.log(1.0 - score_bkg), -100.0)
    loss_be = -jnp.mean(inv_c * log_b + (1.0 - inv_c) * log_1mb)

    loss_total = loss_cls + alpha * loss_um + beta * loss_be

    out_ref[0] = loss_cls
    out_ref[1] = loss_be
    out_ref[2] = loss_um
    out_ref[3] = loss_total


# ---------------------------------------------------------------------------
# Tiling helpers (generation- and dtype-aware).
# ---------------------------------------------------------------------------
def _vmem_budget_and_cap():
    """(streamed-working-set budget, vmem_limit cap) for this TPU generation."""
    try:
        vmem = int(pltpu.get_tpu_info().vmem_capacity_bytes)
    except Exception:
        vmem = 64 << 20                      # conservative (v7x per-TC size)
    if vmem >= (100 << 20):                  # v5e / v6e: 128 MiB VMEM
        return 80 << 20, 96 << 20
    return 40 << 20, 48 << 20                # v7x: 64 MiB per TensorCore


def _choose_t_tile(B, T, D, itemsize, budget_bytes):
    """Largest aligned T tile s.t. 2 inputs x 2 pipeline buffers fit budget."""
    align = 8 if itemsize >= 4 else 16       # bf16/fp16 pack 16 rows / sublane
    per_row = 2 * 2 * B * D * itemsize       # 2 inputs x 2 buffers
    t_tile = budget_bytes // per_row
    if t_tile >= T:
        return T                              # whole T in one (full-dim) block
    t_tile = max(align, (t_tile // align) * align)
    return min(t_tile, T)


# ---------------------------------------------------------------------------
# Wrapper.
# ---------------------------------------------------------------------------
def um_loss(score_act, score_bkg, feat_act, feat_bkg, label, *,
            alpha=0.0005, beta=0.2, margin=100.0, t_tile=None):
    B, C = score_act.shape
    _, T, D = feat_act.shape
    itemsize = max(jnp.dtype(feat_act.dtype).itemsize,
                   jnp.dtype(feat_bkg.dtype).itemsize)

    budget, cap = _vmem_budget_and_cap()
    if t_tile is None:
        t_tile = _choose_t_tile(B, T, D, int(itemsize), budget)
    t_tile = int(t_tile)

    nt_total = -(-T // t_tile)                       # cdiv(T, t_tile)
    num_splits = 2 if nt_total >= 2 else 1           # engage both v7x TCs
    nt_per_split = -(-nt_total // num_splits)

    feat_tile_bytes = B * t_tile * D * int(itemsize)
    sum_block_bytes = B * D * 4

    # Optional triple-buffering only when tiles are small AND it still fits.
    use_triple = (t_tile < 128 and nt_per_split >= 4 and
                  2 * 3 * feat_tile_bytes + 4 * sum_block_bytes + (2 << 20) <= cap)
    n_buf = 3 if use_triple else 2

    needed = 2 * n_buf * feat_tile_bytes + 4 * sum_block_bytes + (2 << 20)
    vmem_limit = int(min(max(needed, 4 << 20), cap))

    def feat_index_map(c, t):
        # Clamp overrun tiles of the second split to a valid block; the in-kernel
        # mask zeroes their contribution.
        g = jnp.minimum(c * nt_per_split + t, nt_total - 1)
        return (0, g, 0)

    feat_kwargs = {"pipeline_mode": pl.Buffered(3)} if use_triple else {}
    feat_act_spec = pl.BlockSpec((B, t_tile, D), feat_index_map, **feat_kwargs)
    feat_bkg_spec = pl.BlockSpec((B, t_tile, D), feat_index_map, **feat_kwargs)
    sum_spec = pl.BlockSpec((1, B, D), lambda c, t: (c, 0, 0))

    sum_kernel = functools.partial(
        _feat_sum_kernel, t_total=int(T), nt_per_split=int(nt_per_split))

    act_sums, bkg_sums = pl.pallas_call(
        sum_kernel,
        out_shape=(jax.ShapeDtypeStruct((num_splits, B, D), jnp.float32),
                   jax.ShapeDtypeStruct((num_splits, B, D), jnp.float32)),
        grid_spec=pltpu.PrefetchScalarGridSpec(
            num_scalar_prefetch=0,
            grid=(num_splits, nt_per_split),
            in_specs=[feat_act_spec, feat_bkg_spec],
            out_specs=[sum_spec, sum_spec]),
        compiler_params=pltpu.CompilerParams(
            dimension_semantics=("parallel", "arbitrary"),
            vmem_limit_bytes=vmem_limit),
    )(feat_act, feat_bkg)

    # Pack the three tiny (B, C) inputs into one array -> single small DMA.
    scores = jnp.stack(
        [score_act.astype(jnp.float32),
         score_bkg.astype(jnp.float32),
         label.astype(jnp.float32)], axis=0)                     # (3, B, C)

    fin_kernel = functools.partial(
        _finalize_kernel, alpha=float(alpha), beta=float(beta),
        margin=float(margin), t_total=int(T))

    out = pl.pallas_call(
        fin_kernel,
        out_shape=jax.ShapeDtypeStruct((4,), jnp.float32),
        grid_spec=pltpu.PrefetchScalarGridSpec(
            num_scalar_prefetch=0,
            grid=(1,),
            in_specs=[
                pl.BlockSpec((3, B, C), lambda i: (0, 0, 0)),
                pl.BlockSpec((num_splits, B, D), lambda i: (0, 0, 0)),
                pl.BlockSpec((num_splits, B, D), lambda i: (0, 0, 0)),
            ],
            out_specs=pl.BlockSpec(memory_space=pltpu.MemorySpace.SMEM)),
        compiler_params=pltpu.CompilerParams(
            dimension_semantics=("arbitrary",)),
    )(scores, act_sums, bkg_sums)

    loss = {
        "loss_cls": out[0],
        "loss_be": out[1],
        "loss_um": out[2],
        "loss_total": out[3],
    }
    return out[3], loss


# ---------------------------------------------------------------------------
# Pure-JAX reference (mirrors the PyTorch module).
# ---------------------------------------------------------------------------
def _um_loss_reference(score_act, score_bkg, feat_act, feat_bkg, label,
                       alpha, beta, margin):
    def bce_mean(p, y):
        logp = jnp.maximum(jnp.log(p), -100.0)
        log1mp = jnp.maximum(jnp.log(1.0 - p), -100.0)
        return -jnp.mean(y * logp + (1.0 - y) * log1mp)

    label = label / jnp.sum(label, axis=1, keepdims=True)
    loss_cls = bce_mean(score_act, label)
    label_bkg = jnp.full_like(label, 1.0 / label.shape[1])
    loss_be = bce_mean(score_bkg, label_bkg)
    fa = jnp.linalg.norm(jnp.mean(feat_act.astype(jnp.float32), axis=1), axis=1)
    fb = jnp.linalg.norm(jnp.mean(feat_bkg.astype(jnp.float32), axis=1), axis=1)
    loss_um = jnp.mean((jnp.maximum(margin - fa, 0.0) + fb) ** 2)
    return loss_cls + alpha * loss_um + beta * loss_be


if __name__ == "__main__":
    alpha, beta, margin = 0.0005, 0.2, 100.0
    key = jax.random.PRNGKey(0)

    # ---- check 1: small f32 inputs, auto-chosen tiling (single tile/split) ----
    B, C, T, D = 2, 4, 8, 32
    k1, k2, k3, k4, k5, key = jax.random.split(key, 6)
    score_act = jax.random.uniform(k1, (B, C), jnp.float32, 0.05, 0.95)
    score_bkg = jax.random.uniform(k2, (B, C), jnp.float32, 0.05, 0.95)
    feat_act = jax.random.normal(k3, (B, T, D), jnp.float32)
    feat_bkg = jax.random.normal(k4, (B, T, D), jnp.float32)
    label = (jax.random.uniform(k5, (B, C)) > 0.5).astype(jnp.float32)
    label = label.at[:, 0].set(1.0)

    loss_total, loss = um_loss(score_act, score_bkg, feat_act, feat_bkg, label,
                               alpha=alpha, beta=beta, margin=margin)
    jax.block_until_ready(loss_total)
    ref = _um_loss_reference(score_act, score_bkg, feat_act, feat_bkg, label,
                             alpha, beta, margin)
    assert jnp.allclose(loss_total, ref, rtol=1e-4, atol=1e-4), (loss_total, ref)

    # ---- check 2: ragged T, bf16 features, forced small tile -> exercises the
    #      masked tail, the clamped overrun tile, and the 2-way split path ----
    B2, C2, T2, D2 = 2, 4, 40, 128
    k1, k2, k3, k4, k5, key = jax.random.split(key, 6)
    score_act2 = jax.random.uniform(k1, (B2, C2), jnp.float32, 0.05, 0.95)
    score_bkg2 = jax.random.uniform(k2, (B2, C2), jnp.float32, 0.05, 0.95)
    feat_act2 = jax.random.normal(k3, (B2, T2, D2), jnp.float32).astype(jnp.bfloat16)
    feat_bkg2 = jax.random.normal(k4, (B2, T2, D2), jnp.float32).astype(jnp.bfloat16)
    label2 = (jax.random.uniform(k5, (B2, C2)) > 0.5).astype(jnp.float32)
    label2 = label2.at[:, 0].set(1.0)

    loss_total2, _ = um_loss(score_act2, score_bkg2, feat_act2, feat_bkg2,
                             label2, alpha=alpha, beta=beta, margin=margin,
                             t_tile=16)
    jax.block_until_ready(loss_total2)
    ref2 = _um_loss_reference(score_act2, score_bkg2, feat_act2, feat_bkg2,
                              label2, alpha, beta, margin)
    assert jnp.allclose(loss_total2, ref2, rtol=1e-3, atol=1e-3), (loss_total2, ref2)

    print("KERNEL_OK")
</pallas_src>

<mosaic_0001>
module attributes {stable_mosaic.version = 11 : i64} {
  func.func @_feat_sum_kernel(%arg0: i32, %arg1: i32, %arg2: memref<2x8x32xf32, #tpu.memory_space<vmem>>, %arg3: memref<2x8x32xf32, #tpu.memory_space<vmem>>, %arg4: memref<1x2x32xf32, #tpu.memory_space<vmem>>, %arg5: memref<1x2x32xf32, #tpu.memory_space<vmem>>) attributes {dimension_semantics = [#tpu.dimension_semantics<parallel>, #tpu.dimension_semantics<arbitrary>], iteration_bounds = array<i64: 1, 1>, scalar_prefetch = 0 : i64, scratch_operands = 0 : i64, tpu.core_type = #tpu.core_type<tc>, window_params = [{transform_indices = @transform_0, window_bounds = array<i64: 2, 8, 32>}, {transform_indices = @transform_1, window_bounds = array<i64: 2, 8, 32>}, {transform_indices = @transform_2, window_bounds = array<i64: 1, 2, 32>}, {transform_indices = @transform_3, window_bounds = array<i64: 1, 2, 32>}]} {
    %c0_i32 = arith.constant 0 : i32
    %0 = arith.cmpi eq, %arg1, %c0_i32 : i32
    %1 = arith.extui %0 : i1 to i32
    %c0_i32_0 = arith.constant 0 : i32
    %2 = arith.cmpi ne, %1, %c0_i32_0 : i32
    scf.if %2 {
      %cst_22 = arith.constant 0.000000e+00 : f32
      %31 = vector.broadcast %cst_22 : f32 to vector<1x2x32xf32>
      %c0_23 = arith.constant 0 : index
      %c0_24 = arith.constant 0 : index
      %c0_25 = arith.constant 0 : index
      %32 = vector.load %arg4[%c0_23, %c0_24, %c0_25] : memref<1x2x32xf32, #tpu.memory_space<vmem>>, vector<1x2x32xf32>
      tpu.vector_store %arg4[%c0_23, %c0_24, %c0_25], %31 {strides = array<i32>} : memref<1x2x32xf32, #tpu.memory_space<vmem>>, vector<1x2x32xf32>,
      %cst_26 = arith.constant 0.000000e+00 : f32
      %33 = vector.broadcast %cst_26 : f32 to vector<1x2x32xf32>
      %c0_27 = arith.constant 0 : index
      %c0_28 = arith.constant 0 : index
      %c0_29 = arith.constant 0 : index
      %34 = vector.load %arg5[%c0_27, %c0_28, %c0_29] : memref<1x2x32xf32, #tpu.memory_space<vmem>>, vector<1x2x32xf32>
      tpu.vector_store %arg5[%c0_27, %c0_28, %c0_29], %33 {strides = array<i32>} : memref<1x2x32xf32, #tpu.memory_space<vmem>>, vector<1x2x32xf32>,
    } else {
    }
    %c1_i32 = arith.constant 1 : i32
    %3 = arith.muli %arg0, %c1_i32 : i32
    %4 = arith.addi %3, %arg1 : i32
    %c8_i32 = arith.constant 8 : i32
    %5 = arith.muli %4, %c8_i32 : i32
    %6 = tpu.iota {dimensions = array<i32: 1>} : vector<1x8x1xi32>
    %7 = vector.broadcast %5 : i32 to vector<1x8x1xi32>
    %8 = arith.addi %7, %6 : vector<1x8x1xi32>
    %c8_i32_1 = arith.constant 8 : i32
    %9 = vector.broadcast %c8_i32_1 : i32 to vector<1x8x1xi32>
    %10 = arith.cmpi slt, %8, %9 : vector<1x8x1xi32>
    %c0 = arith.constant 0 : index
    %c0_2 = arith.constant 0 : index
    %c0_3 = arith.constant 0 : index
    %11 = vector.load %arg2[%c0, %c0_2, %c0_3] : memref<2x8x32xf32, #tpu.memory_space<vmem>>, vector<2x8x32xf32>
    %cst = arith.constant 0.000000e+00 : f32
    %12 = vector.shape_cast %10 : vector<1x8x1xi1> to vector<1x8x1xi1>
    %13 = vector.broadcast %12 : vector<1x8x1xi1> to vector<2x8x32xi1>
    %14 = vector.broadcast %cst : f32 to vector<2x8x32xf32>
    %15 = arith.select %13, %11, %14 : vector<2x8x32xi1>, vector<2x8x32xf32>
    %c0_4 = arith.constant 0 : index
    %c0_5 = arith.constant 0 : index
    %c0_6 = arith.constant 0 : index
    %16 = vector.load %arg3[%c0_4, %c0_5, %c0_6] : memref<2x8x32xf32, #tpu.memory_space<vmem>>, vector<2x8x32xf32>
    %cst_7 = arith.constant 0.000000e+00 : f32
    %17 = vector.shape_cast %10 : vector<1x8x1xi1> to vector<1x8x1xi1>
    %18 = vector.broadcast %17 : vector<1x8x1xi1> to vector<2x8x32xi1>
    %19 = vector.broadcast %cst_7 : f32 to vector<2x8x32xf32>
    %20 = arith.select %18, %16, %19 : vector<2x8x32xi1>, vector<2x8x32xf32>
    %c0_8 = arith.constant 0 : index
    %c0_9 = arith.constant 0 : index
    %c0_10 = arith.constant 0 : index
    %21 = vector.load %arg4[%c0_8, %c0_9, %c0_10] : memref<1x2x32xf32, #tpu.memory_space<vmem>>, vector<1x2x32xf32>
    %cst_11 = arith.constant dense<0.000000e+00> : vector<2x32xf32>
    %22 = vector.multi_reduction <add>, %15, %cst_11 [1] : vector<2x8x32xf32> to vector<2x32xf32>
    %23 = vector.shape_cast %22 : vector<2x32xf32> to vector<1x2x32xf32>
    %24 = arith.addf %21, %23 : vector<1x2x32xf32>
    %c0_12 = arith.constant 0 : index
    %c0_13 = arith.constant 0 : index
    %c0_14 = arith.constant 0 : index
    %25 = vector.load %arg4[%c0_12, %c0_13, %c0_14] : memref<1x2x32xf32, #tpu.memory_space<vmem>>, vector<1x2x32xf32>
    tpu.vector_store %arg4[%c0_12, %c0_13, %c0_14], %24 {strides = array<i32>} : memref<1x2x32xf32, #tpu.memory_space<vmem>>, vector<1x2x32xf32>,
    %c0_15 = arith.constant 0 : index
    %c0_16 = arith.constant 0 : index
    %c0_17 = arith.constant 0 : index
    %26 = vector.load %arg5[%c0_15, %c0_16, %c0_17] : memref<1x2x32xf32, #tpu.memory_space<vmem>>, vector<1x2x32xf32>
    %cst_18 = arith.constant dense<0.000000e+00> : vector<2x32xf32>
    %27 = vector.multi_reduction <add>, %20, %cst_18 [1] : vector<2x8x32xf32> to vector<2x32xf32>
    %28 = vector.shape_cast %27 : vector<2x32xf32> to vector<1x2x32xf32>
    %29 = arith.addf %26, %28 : vector<1x2x32xf32>
    %c0_19 = arith.constant 0 : index
    %c0_20 = arith.constant 0 : index
    %c0_21 = arith.constant 0 : index
    %30 = vector.load %arg5[%c0_19, %c0_20, %c0_21] : memref<1x2x32xf32, #tpu.memory_space<vmem>>, vector<1x2x32xf32>
    tpu.vector_store %arg5[%c0_19, %c0_20, %c0_21], %29 {strides = array<i32>} : memref<1x2x32xf32, #tpu.memory_space<vmem>>, vector<1x2x32xf32>,
    return
  }
  func.func @transform_0(%arg0: i32, %arg1: i32) -> (i32, i32, i32) {
    %c1_i32 = arith.constant 1 : i32
    %0 = arith.muli %arg0, %c1_i32 : i32
    %1 = arith.addi %0, %arg1 : i32
    %c0_i32 = arith.constant 0 : i32
    %2 = arith.minsi %1, %c0_i32 : i32
    %c0_i32_0 = arith.constant 0 : i32
    %c0_i32_1 = arith.constant 0 : i32
    %c0_i32_2 = arith.constant 0 : i32
    return %c0_i32_0, %2, %c0_i32_1 : i32, i32, i32
  }
  func.func @transform_1(%arg0: i32, %arg1: i32) -> (i32, i32, i32) {
    %c1_i32 = arith.constant 1 : i32
    %0 = arith.muli %arg0, %c1_i32 : i32
    %1 = arith.addi %0, %arg1 : i32
    %c0_i32 = arith.constant 0 : i32
    %2 = arith.minsi %1, %c0_i32 : i32
    %c0_i32_0 = arith.constant 0 : i32
    %c0_i32_1 = arith.constant 0 : i32
    %c0_i32_2 = arith.constant 0 : i32
    return %c0_i32_0, %2, %c0_i32_1 : i32, i32, i32
  }
  func.func @transform_2(%arg0: i32, %arg1: i32) -> (i32, i32, i32) {
    %c0_i32 = arith.constant 0 : i32
    %c0_i32_0 = arith.constant 0 : i32
    %c0_i32_1 = arith.constant 0 : i32
    return %arg0, %c0_i32, %c0_i32_0 : i32, i32, i32
  }
  func.func @transform_3(%arg0: i32, %arg1: i32) -> (i32, i32, i32) {
    %c0_i32 = arith.constant 0 : i32
    %c0_i32_0 = arith.constant 0 : i32
    %c0_i32_1 = arith.constant 0 : i32
    return %arg0, %c0_i32, %c0_i32_0 : i32, i32, i32
  }
}

</mosaic_0001>

<llo_original>
// kernel: tpu_custom_call.1
$region0: #{tpu_custom_call.1}
  #allocation0 [shape = 'u32[]', space=smem, size = 0x4, offset = 0x4, fixed_abs, tag = 'smem constant byte address 0x4 - core index']
  #allocation1 [shape = 'u32[144,128]{1,0:T(1,128)}', space=vmem, size = 0x12000, scoped, tag = 'internal scratch']
  %s0 = inlined_call_operand.hbm [shape: f32[2,8,32], index: 0, kind: input, shape index: {}]
  %s1 = inlined_call_operand.hbm [shape: f32[2,8,32], index: 1, kind: input, shape index: {}]
  %s2 = inlined_call_operand.hbm [shape: f32[1,2,32], index: 2, kind: output, shape index: {0}]
  %s3 = inlined_call_operand.hbm [shape: f32[1,2,32], index: 3, kind: output, shape index: {1}]
  %4 = xla_tuple %s2, %s3
  %s5 = sld [smem:[#allocation0]]
  $region38: #{tpu_custom_call.1} parent=0
    _
  %s7 = ssub.s32 1, %s5
  %s8 = scalar_select 0, %s7, %s5
  $region1: #{tpu_custom_call.1} parent=0
    #allocation2 [shape = 'u8[8192]{0}', space=vmem, size = 0x2000, scoped, tag = 'input window, operand 0, single buffered']
    #allocation3 [shape = 's32[1]{0}', space=sflag, size = 0x4, scoped, tag = 'scoped memory for tpu_custom_call.1']
    #allocation4 [shape = 's32[1]{0}', space=sflag, size = 0x4, scoped, tag = 'scoped memory for tpu_custom_call.1']
    #allocation5 [shape = 'u8[8192]{0}', space=vmem, size = 0x2000, scoped, tag = 'input window, operand 1, single buffered']
    #allocation6 [shape = 's32[1]{0}', space=sflag, size = 0x4, scoped, tag = 'scoped memory for tpu_custom_call.1']
    #allocation7 [shape = 'u8[1024]{0}', space=vmem, size = 0x400, scoped, tag = 'output window, operand 0, single buffered']
    #allocation8 [shape = 'u8[1024]{0}', space=vmem, size = 0x400, scoped, tag = 'output window, operand 1, single buffered']
    #allocation9 [shape = 's32[1]{0}', space=sflag, size = 0x4, scoped, tag = 'scoped memory for tpu_custom_call.1']
    %9 = vsyncpa [#allocation3], 0
    %10 = vsyncpa [#allocation6], 0
    %11 = vsyncpa [#allocation4], 0
    %12 = vsyncpa [#allocation9], 0
    // Predicated region
    $region2: #{tpu_custom_call.1} parent=1 // pred_check
      _
    $region3: #{tpu_custom_call.1} parent=1 // pred_check_branch
      %14 = sbr.rel (0) target = $region5
    $region4: #{tpu_custom_call.1} parent=1 // pred_region
      %s15 = sadd.s32 0, 0
      %p16 = scmp.lt.s32.totalorder %s15, 0
      %s17 = scalar_select %p16, %s15, 0
      %s19 = ssub.s32 256, 256
      %20 = vsyncadd [#allocation3], %s19
      %s21 = smul.addr %s17, 128
      %s22 = scalar_lea.hbm %s0, %s21
      %s23 = sshll.u32 [#allocation2], 4
      %s24 = int_to_ptr.vmem [resolvable:$true] %s23
      %29 = dma.hbm_to_vmem [thread:$0]  %s22, 256, %s24, [#allocation3], 128, 128, 8
    $region5: #{tpu_custom_call.1} parent=1 // pred_fallthru
      _
    // Predicated region
    $region6: #{tpu_custom_call.1} parent=1 // pred_check
      _
    $region7: #{tpu_custom_call.1} parent=1 // pred_check_branch
      %31 = sbr.rel (0) target = $region9
    $region8: #{tpu_custom_call.1} parent=1 // pred_region
      %s32 = sadd.s32 0, 0
      %p33 = scmp.lt.s32.totalorder %s32, 0
      %s34 = scalar_select %p33, %s32, 0
      %s36 = ssub.s32 256, 256
      %37 = vsyncadd [#allocation6], %s36
      %s38 = smul.addr %s34, 128
      %s39 = scalar_lea.hbm %s1, %s38
      %s40 = sshll.u32 [#allocation5], 4
      %s41 = int_to_ptr.vmem [resolvable:$true] %s40
      %46 = dma.hbm_to_vmem [thread:$0]  %s39, 256, %s41, [#allocation6], 128, 128, 8
    $region9: #{tpu_custom_call.1} parent=1 // pred_fallthru
      _
    // Predicated region
    $region10: #{tpu_custom_call.1} parent=1 // pred_check
      _
    $region11: #{tpu_custom_call.1} parent=1 // pred_check_branch
      %48 = sbr.rel (0) target = $region13
    $region12: #{tpu_custom_call.1} parent=1 // pred_region
      %49 = dma.done [#allocation3], 256
    $region13: #{tpu_custom_call.1} parent=1 // pred_fallthru
      _
    // Predicated region
    $region14: #{tpu_custom_call.1} parent=1 // pred_check
      _
    $region15: #{tpu_custom_call.1} parent=1 // pred_check_branch
      %51 = sbr.rel (0) target = $region17
    $region16: #{tpu_custom_call.1} parent=1 // pred_region
      %52 = dma.done [#allocation6], 256
    $region17: #{tpu_custom_call.1} parent=1 // pred_fallthru
      _
    %s53 = sadd.s32 0, 0
    %p54 = scmp.lt.s32.totalorder %s53, 0
    %s55 = scalar_select %p54, %s53, 0
    %s56 = sadd.s32 0, 0
    %p57 = scmp.lt.s32.totalorder %s56, 0
    %s58 = scalar_select %p57, %s56, 0
    %p59 = scmp.eq.s32.totalorder 0, 0
    // Predicated region
    $region18: #{tpu_custom_call.1} parent=1 // pred_check
      %p60 = pneg %p59
    $region19: #{tpu_custom_call.1} parent=1 // pred_check_branch
      %62 = sbr.rel (%p60) target = $region21
    $region20: #{tpu_custom_call.1} parent=1 // pred_region
      %vm63 = vcmask 254976
      %64 = vst.msk [vmem:[#allocation7] sm:$0x3] %vm63, 0.0
      %65 = vst.msk [vmem:[#allocation8] sm:$0x3] %vm63, 0.0
    $region21: #{tpu_custom_call.1} parent=1 // pred_fallthru
      _
    %s66 = sadd.s32 0, 0
    %s67 = smul.u32 %s66, 8
    %v68 = vlaneseq
    %v69 = vshrl.u32 %v68, 7
    %v70 = vstv %s67
    %v71 = vadd.s32 %v70, %v69
    %vm72 = vcmp.lt.s32.totalorder %v71, 8
    %v73 = vld [vmem:[#allocation2] sm:$0xff]
    %v74 = vld [vmem:[#allocation2 + $0x8] sm:$0xff]
    %v75 = vsel %vm72, 1, 0
    %vm76 = vcmp.eq.s32.totalorder %v75, 1
    %v77 = vsel %vm76, %v73, 0.0
    %v78 = vsel %vm76, %v74, 0.0
    %v79 = vld [vmem:[#allocation5] sm:$0xff]
    %v80 = vld [vmem:[#allocation5 + $0x8] sm:$0xff]
    %v81 = vsel %vm76, %v79, 0.0
    %v82 = vsel %vm76, %v80, 0.0
    %v83 = vld [vmem:[#allocation7] sm:$0x3]
    %vm84 = vcmask 261120
    %v85 = vsel %vm84, %v77, 0.0
    %v86 = vrot.slane %v85, 4
    %v87 = vadd.f32 %v85, %v86
    %v88 = vrot.slane %v87, 2
    %v89 = vadd.f32 %v87, %v88
    %v90 = vrot.slane %v89, 1
    %v91 = vadd.f32 %v89, %v90
    %v92 = vsel %vm84, %v78, 0.0
    %v93 = vrot.slane %v92, 4
    %v94 = vadd.f32 %v92, %v93
    %v95 = vrot.slane %v94, 2
    %v96 = vadd.f32 %v94, %v95
    %v97 = vrot.slane %v96, 1
    %v98 = vadd.f32 %v96, %v97
    %vm101 = vcmask 1041409
    %v102 = vsel %vm101, %v98, %v91
    %v104 = vadd.f32 %v83, %v102
    %vm105 = vcmask 254976
    %106 = vst.msk [vmem:[#allocation7] sm:$0x3] %vm105, %v104
    %v107 = vld [vmem:[#allocation8] sm:$0x3]
    %v108 = vsel %vm84, %v81, 0.0
    %v109 = vrot.slane %v108, 4
    %v110 = vadd.f32 %v108, %v109
    %v111 = vrot.slane %v110, 2
    %v112 = vadd.f32 %v110, %v111
    %v113 = vrot.slane %v112, 1
    %v114 = vadd.f32 %v112, %v113
    %v115 = vsel %vm84, %v82, 0.0
    %v116 = vrot.slane %v115, 4
    %v117 = vadd.f32 %v115, %v116
    %v118 = vrot.slane %v117, 2
    %v119 = vadd.f32 %v117, %v118
    %v120 = vrot.slane %v119, 1
    %v121 = vadd.f32 %v119, %v120
    %v124 = vsel %vm101, %v121, %v114
    %v126 = vadd.f32 %v107, %v124
    %127 = vst.msk [vmem:[#allocation8] sm:$0x3] %vm105, %v126
    // Predicated region
    $region22: #{tpu_custom_call.1} parent=1 // pred_check
      _
    $region23: #{tpu_custom_call.1} parent=1 // pred_check_branch
      %129 = sbr.rel (0) target = $region25
    $region24: #{tpu_custom_call.1} parent=1 // pred_region
      %s131 = ssub.s32 32, 32
      %132 = vsyncadd [#allocation4], %s131
      %s134 = sshll.u32 [#allocation7], 4
      %s135 = int_to_ptr.vmem [resolvable:$true] %s134
      %137 = dma.vmem_to_hbm [thread:$0]  %s135, 32, %s2, [#allocation4]
    $region25: #{tpu_custom_call.1} parent=1 // pred_fallthru
      _
    // Predicated region
    $region26: #{tpu_custom_call.1} parent=1 // pred_check
      _
    $region27: #{tpu_custom_call.1} parent=1 // pred_check_branch
      %139 = sbr.rel (0) target = $region29
    $region28: #{tpu_custom_call.1} parent=1 // pred_region
      %s141 = ssub.s32 32, 32
      %142 = vsyncadd [#allocation9], %s141
      %s144 = sshll.u32 [#allocation8], 4
      %s145 = int_to_ptr.vmem [resolvable:$true] %s144
      %147 = dma.vmem_to_hbm [thread:$0]  %s145, 32, %s3, [#allocation9]
    $region29: #{tpu_custom_call.1} parent=1 // pred_fallthru
      _
    // Predicated region
    $region30: #{tpu_custom_call.1} parent=1 // pred_check
      _
    $region31: #{tpu_custom_call.1} parent=1 // pred_check_branch
      %149 = sbr.rel (0) target = $region33
    $region32: #{tpu_custom_call.1} parent=1 // pred_region
      %150 = dma.done [#allocation4], 32
    $region33: #{tpu_custom_call.1} parent=1 // pred_fallthru
      _
    // Predicated region
    $region34: #{tpu_custom_call.1} parent=1 // pred_check
      _
    $region35: #{tpu_custom_call.1} parent=1 // pred_check_branch
      %152 = sbr.rel (0) target = $region37
    $region36: #{tpu_custom_call.1} parent=1 // pred_region
      %153 = dma.done [#allocation9], 32
    $region37: #{tpu_custom_call.1} parent=1 // pred_fallthru
      _
    %154 = vsyncpa [#allocation3], 1
    %155 = vsyncpa [#allocation6], 1
    %156 = vsyncpa [#allocation4], 1
    %157 = vsyncpa [#allocation9], 1

</llo_original>
